<compile_context>
chip_gen: v6e
topology: v6e:2x2x1
jax: 0.10.0
libtpu: 0.0.40
codegen_flags: <defaults>
</compile_context>

<pallas_src>
import functools

import numpy as np
import jax
import jax.numpy as jnp
from jax import lax
from jax.experimental import pallas as pl
from jax.experimental.pallas import tpu as pltpu

LANES = 128                     # ray-index lane width (fast axis)
MAX_TILE_ROWS = 512             # up to 512 x 128 = 65536 rays per grid step
MAX_FOLD_N = 8                  # fold batch into the kernel when N <= this
VMEM_LIMIT_BYTES = 32 * 1024 * 1024


def _ray_kernel(xs_ref, ys_ref, aff_ref, dirs_ref):
    """grid = (ray_tiles, N): one (tile_rows, 128) ray tile for one batch n.

    xs_ref, ys_ref : (R, 128)            f32 pixel coords of masked rays (VMEM)
    aff_ref        : (9*N,)              f32 flat per-batch affine (SMEM)
    dirs_ref       : (1, 3, R, 128)      normalized ray dirs, channel-major
    """
    n = pl.program_id(1)
    b = n * 9
    xs = xs_ref[...]
    ys = ys_ref[...]
    dx = aff_ref[b + 0] * xs + aff_ref[b + 1] * ys + aff_ref[b + 2]
    dy = aff_ref[b + 3] * xs + aff_ref[b + 4] * ys + aff_ref[b + 5]
    dz = aff_ref[b + 6] * xs + aff_ref[b + 7] * ys + aff_ref[b + 8]
    # F.normalize: x / max(||x||, 1e-12)  ==  x * rsqrt(max(||x||^2, 1e-24))
    inv = lax.rsqrt(jnp.maximum(dx * dx + dy * dy + dz * dz, 1e-24))
    dirs_ref[0, 0, :, :] = (dx * inv).astype(dirs_ref.dtype)
    dirs_ref[0, 1, :, :] = (dy * inv).astype(dirs_ref.dtype)
    dirs_ref[0, 2, :, :] = (dz * inv).astype(dirs_ref.dtype)


def _ray_kernel_folded(xs_ref, ys_ref, aff_ref, dirs_ref, *, n_batch):
    """grid = (ray_tiles,): one ray tile, all batches (unrolled, small N).

    dirs_ref : (N, 3, R, 128)
    """
    xs = xs_ref[...]
    ys = ys_ref[...]
    for n in range(n_batch):            # unrolled at trace time
        b = n * 9
        dx = aff_ref[b + 0] * xs + aff_ref[b + 1] * ys + aff_ref[b + 2]
        dy = aff_ref[b + 3] * xs + aff_ref[b + 4] * ys + aff_ref[b + 5]
        dz = aff_ref[b + 6] * xs + aff_ref[b + 7] * ys + aff_ref[b + 8]
        inv = lax.rsqrt(jnp.maximum(dx * dx + dy * dy + dz * dz, 1e-24))
        dirs_ref[n, 0, :, :] = (dx * inv).astype(dirs_ref.dtype)
        dirs_ref[n, 1, :, :] = (dy * inv).astype(dirs_ref.dtype)
        dirs_ref[n, 2, :, :] = (dz * inv).astype(dirs_ref.dtype)


# ----------------------------------------------------------------------------
# Host-side mask -> padded (rows, 128) coordinate layout, cached per mask.
# ----------------------------------------------------------------------------
_MASK_LAYOUT_CACHE = {}


def _mask_layout(mask):
    mask_np = np.asarray(mask)
    key = (mask_np.shape, mask_np.dtype.str, mask_np.tobytes())
    hit = _MASK_LAYOUT_CACHE.get(key)
    if hit is not None:
        return hit
    # TODO(synk): torch.where(mask == 1) has a data-dependent output shape;
    # masked coordinate compaction is done host-side (numpy, cached) and
    # cannot be jit-traced with a traced mask.
    y_coords, x_coords = np.nonzero(mask_np == 1)      # row-major == torch.where
    M = int(x_coords.shape[0])
    rows = max(1, -(-M // LANES))
    n_tiles = -(-rows // MAX_TILE_ROWS)
    tile_rows = ((-(-rows // n_tiles) + 7) // 8) * 8   # tightest multiple of 8
    rows_pad = n_tiles * tile_rows
    xs = np.zeros((rows_pad, LANES), np.float32)
    ys = np.zeros((rows_pad, LANES), np.float32)
    xs.reshape(-1)[:M] = x_coords
    ys.reshape(-1)[:M] = y_coords
    layout = (M, tile_rows, rows_pad, jnp.asarray(xs), jnp.asarray(ys))
    _MASK_LAYOUT_CACHE[key] = layout
    return layout


def masked_ray_sampler(cam2world_matrix, intrinsics, resolution, mask,
                       *, channel_major=False, out_dtype=jnp.float32,
                       fold_batch=None):
    """JAX/Pallas equivalent of MaskedRaySampler.forward."""
    cam2world_matrix = jnp.asarray(cam2world_matrix, jnp.float32)
    intrinsics = jnp.asarray(intrinsics, jnp.float32)
    N = cam2world_matrix.shape[0]

    M, tile_rows, rows_pad, xs, ys = _mask_layout(mask)
    m_pad = rows_pad * LANES
    ray_tiles = rows_pad // tile_rows

    # Composite per-batch affine: ray_dir = A @ [x_pix, y_pix, 1]^T with
    #   A = R[:3,:3] @ [[s/fx, 0, -cx/fx], [0, s/fy, -cy/fy], [0, 0, 1]],
    #   s = resolution / (resolution - 1)   (the /(res-1) * res of the ref).
    # The cam2world translation cancels in (world_point - cam_loc), so only
    # the rotation block participates.
    scale = float(resolution) / (float(resolution) - 1.0)
    R = cam2world_matrix[:, :3, :3]
    fx = intrinsics[:, 0, 0]
    fy = intrinsics[:, 1, 1]
    cx = intrinsics[:, 0, 2]
    cy = intrinsics[:, 1, 2]
    col_x = R[:, :, 0] * (scale / fx)[:, None]
    col_y = R[:, :, 1] * (scale / fy)[:, None]
    col_1 = (R[:, :, 2]
             - R[:, :, 0] * (cx / fx)[:, None]
             - R[:, :, 1] * (cy / fy)[:, None])
    aff = jnp.stack([col_x, col_y, col_1], axis=-1).reshape(N * 9)   # flat 1-D SMEM

    if fold_batch is None:
        fold_batch = (N <= MAX_FOLD_N) and (ray_tiles >= 2)

    out_shape = jax.ShapeDtypeStruct((N, 3, rows_pad, LANES), out_dtype)

    if fold_batch:
        kernel = functools.partial(_ray_kernel_folded, n_batch=N)
        dirs_t = pl.pallas_call(
            kernel,
            grid=(ray_tiles,),
            in_specs=[
                pl.BlockSpec((tile_rows, LANES), lambda j: (j, 0)),          # xs
                pl.BlockSpec((tile_rows, LANES), lambda j: (j, 0)),          # ys
                pl.BlockSpec(memory_space=pltpu.MemorySpace.SMEM),           # aff
            ],
            out_specs=pl.BlockSpec((N, 3, tile_rows, LANES), lambda j: (0, 0, j, 0)),
            out_shape=out_shape,
            compiler_params=pltpu.CompilerParams(
                dimension_semantics=("parallel",),
                vmem_limit_bytes=VMEM_LIMIT_BYTES),
        )(xs, ys, aff)
    else:
        dirs_t = pl.pallas_call(
            _ray_kernel,
            grid=(ray_tiles, N),   # rays outer: xs/ys blocks reused across n
            in_specs=[
                pl.BlockSpec((tile_rows, LANES), lambda j, n: (j, 0)),       # xs
                pl.BlockSpec((tile_rows, LANES), lambda j, n: (j, 0)),       # ys
                pl.BlockSpec(memory_space=pltpu.MemorySpace.SMEM),           # aff
            ],
            out_specs=pl.BlockSpec((1, 3, tile_rows, LANES),
                                   lambda j, n: (n, 0, j, 0)),
            out_shape=out_shape,
            compiler_params=pltpu.CompilerParams(
                dimension_semantics=("parallel", "parallel"),
                vmem_limit_bytes=VMEM_LIMIT_BYTES),
        )(xs, ys, aff)

    dirs_cm = dirs_t.reshape(N, 3, m_pad)[:, :, :M]          # (N, 3, M)
    if channel_major:
        ray_dirs = dirs_cm
    else:
        # Module semantics require (N, M, 3); this transpose re-streams dirs
        # through HBM — pass channel_major=True if the consumer can take (N,3,M).
        ray_dirs = jnp.transpose(dirs_cm, (0, 2, 1))

    # Ray origins: camera location repeated per ray -> pure broadcast glue.
    cam_locs = cam2world_matrix[:, :3, 3]                    # (N, 3)
    ray_origins = jnp.broadcast_to(cam_locs[:, None, :], (N, M, 3))

    # sample_uv: uv.unsqueeze(0).repeat(N,1,1).squeeze(0) * 2 - 1
    uv = jnp.stack([xs.reshape(-1)[:M], ys.reshape(-1)[:M]], axis=-1) \
         / (resolution - 1.0)
    uv_rep = jnp.broadcast_to(uv[None], (N, M, 2))
    sample_uv = (uv_rep[0] if N == 1 else uv_rep) * 2.0 - 1.0
    return ray_origins, ray_dirs, sample_uv


def _reference(cam2world, intrinsics, resolution, mask):
    """Pure numpy mirror of the PyTorch forward (for verification)."""
    cam2world = np.asarray(cam2world, np.float32)
    intrinsics = np.asarray(intrinsics, np.float32)
    N = cam2world.shape[0]
    cam_locs = cam2world[:, :3, 3]
    fx = intrinsics[:, 0, 0]; fy = intrinsics[:, 1, 1]
    cx = intrinsics[:, 0, 2]; cy = intrinsics[:, 1, 2]
    y_coords, x_coords = np.nonzero(np.asarray(mask) == 1)
    uv = np.stack([x_coords.astype(np.float32), y_coords.astype(np.float32)], -1) / (resolution - 1)
    uv = np.repeat(uv[None], N, 0)
    x_cam = (uv[:, :, 0] * resolution - cx[:, None]) / fx[:, None]
    y_cam = (uv[:, :, 1] * resolution - cy[:, None]) / fy[:, None]
    z_cam = np.ones((N, uv.shape[1]), np.float32)
    p = np.stack([x_cam, y_cam, z_cam, np.ones_like(z_cam)], -1)          # (N, M, 4)
    world = np.einsum('nij,nmj->nmi', cam2world, p)[:, :, :3]
    dirs = world - cam_locs[:, None, :]
    nrm = np.maximum(np.linalg.norm(dirs, axis=2, keepdims=True), 1e-12)
    dirs = dirs / nrm
    origins = np.repeat(cam_locs[:, None, :], dirs.shape[1], 1)
    suv = uv[0] if N == 1 else uv
    suv = suv * 2 - 1
    return origins, dirs, suv


if __name__ == "__main__":
    key = jax.random.PRNGKey(0)
    k1, k2 = jax.random.split(key)

    N = 2
    resolution = 16

    # Deterministic cam2world: random rotation (QR) + random translation.
    A = jax.random.normal(k1, (N, 3, 3), jnp.float32)
    Q, _ = jnp.linalg.qr(A)
    t = jax.random.normal(k2, (N, 3), jnp.float32) * 2.0
    cam2world = jnp.zeros((N, 4, 4), jnp.float32)
    cam2world = cam2world.at[:, :3, :3].set(Q)
    cam2world = cam2world.at[:, :3, 3].set(t)
    cam2world = cam2world.at[:, 3, 3].set(1.0)

    intrinsics = jnp.array(
        [[[1.20, 0.0, 0.50], [0.0, 1.10, 0.50], [0.0, 0.0, 1.0]],
         [[1.00, 0.0, 0.45], [0.0, 0.90, 0.55], [0.0, 0.0, 1.0]]],
        dtype=jnp.float32)

    # Deterministic binary mask: disc in a 16x16 image.
    yy, xx = np.meshgrid(np.arange(resolution), np.arange(resolution), indexing="ij")
    mask = (((yy - 7.5) ** 2 + (xx - 7.5) ** 2) <= 36.0).astype(np.int32)

    ref_o, ref_d, ref_uv = _reference(np.array(cam2world), np.array(intrinsics), resolution, mask)

    # Path 1: batch kept as a parallel grid axis (default heuristic here).
    ray_origins, ray_dirs, sample_uv = masked_ray_sampler(
        cam2world, intrinsics, resolution, mask)
    jax.block_until_ready((ray_origins, ray_dirs, sample_uv))
    np.testing.assert_allclose(np.array(ray_origins), ref_o, rtol=1e-5, atol=1e-5)
    np.testing.assert_allclose(np.array(ray_dirs), ref_d, rtol=1e-5, atol=1e-5)
    np.testing.assert_allclose(np.array(sample_uv), ref_uv, rtol=1e-5, atol=1e-5)

    # Path 2: batch folded into the kernel body (forced, to exercise it).
    ray_origins_f, ray_dirs_f, sample_uv_f = masked_ray_sampler(
        cam2world, intrinsics, resolution, mask, fold_batch=True)
    jax.block_until_ready((ray_origins_f, ray_dirs_f, sample_uv_f))
    np.testing.assert_allclose(np.array(ray_origins_f), ref_o, rtol=1e-5, atol=1e-5)
    np.testing.assert_allclose(np.array(ray_dirs_f), ref_d, rtol=1e-5, atol=1e-5)
    np.testing.assert_allclose(np.array(sample_uv_f), ref_uv, rtol=1e-5, atol=1e-5)

    print("KERNEL_OK")
</pallas_src>

<mosaic_0001>
module attributes {stable_mosaic.version = 11 : i64} {
  func.func @_ray_kernel(%arg0: i32, %arg1: i32, %arg2: memref<8x128xf32, #tpu.memory_space<vmem>>, %arg3: memref<8x128xf32, #tpu.memory_space<vmem>>, %arg4: memref<18xf32, #tpu.memory_space<smem>>, %arg5: memref<1x3x8x128xf32, #tpu.memory_space<vmem>>) attributes {dimension_semantics = [#tpu.dimension_semantics<parallel>, #tpu.dimension_semantics<parallel>], iteration_bounds = array<i64: 1, 2>, scalar_prefetch = 0 : i64, scratch_operands = 0 : i64, tpu.core_type = #tpu.core_type<tc>, window_params = [{transform_indices = @transform_0, window_bounds = array<i64: 8, 128>}, {transform_indices = @transform_1, window_bounds = array<i64: 8, 128>}, {transform_indices = @transform_2, window_bounds = array<i64: 18>}, {transform_indices = @transform_3, window_bounds = array<i64: 1, 3, 8, 128>}]} {
    %c9_i32 = arith.constant 9 : i32
    %0 = arith.muli %arg1, %c9_i32 : i32
    %c0 = arith.constant 0 : index
    %c0_0 = arith.constant 0 : index
    %1 = vector.load %arg2[%c0, %c0_0] : memref<8x128xf32, #tpu.memory_space<vmem>>, vector<8x128xf32>
    %c0_1 = arith.constant 0 : index
    %c0_2 = arith.constant 0 : index
    %2 = vector.load %arg3[%c0_1, %c0_2] : memref<8x128xf32, #tpu.memory_space<vmem>>, vector<8x128xf32>
    %c0_i32 = arith.constant 0 : i32
    %3 = arith.addi %0, %c0_i32 : i32
    %4 = arith.index_cast %3 : i32 to index
    %5 = memref.load %arg4[%4] : memref<18xf32, #tpu.memory_space<smem>>
    %6 = vector.broadcast %5 : f32 to vector<8x128xf32>
    %7 = arith.mulf %6, %1 : vector<8x128xf32>
    %c1_i32 = arith.constant 1 : i32
    %8 = arith.addi %0, %c1_i32 : i32
    %9 = arith.index_cast %8 : i32 to index
    %10 = memref.load %arg4[%9] : memref<18xf32, #tpu.memory_space<smem>>
    %11 = vector.broadcast %10 : f32 to vector<8x128xf32>
    %12 = arith.mulf %11, %2 : vector<8x128xf32>
    %13 = arith.addf %7, %12 : vector<8x128xf32>
    %c2_i32 = arith.constant 2 : i32
    %14 = arith.addi %0, %c2_i32 : i32
    %15 = arith.index_cast %14 : i32 to index
    %16 = memref.load %arg4[%15] : memref<18xf32, #tpu.memory_space<smem>>
    %17 = vector.broadcast %16 : f32 to vector<8x128xf32>
    %18 = arith.addf %13, %17 : vector<8x128xf32>
    %c3_i32 = arith.constant 3 : i32
    %19 = arith.addi %0, %c3_i32 : i32
    %20 = arith.index_cast %19 : i32 to index
    %21 = memref.load %arg4[%20] : memref<18xf32, #tpu.memory_space<smem>>
    %22 = vector.broadcast %21 : f32 to vector<8x128xf32>
    %23 = arith.mulf %22, %1 : vector<8x128xf32>
    %c4_i32 = arith.constant 4 : i32
    %24 = arith.addi %0, %c4_i32 : i32
    %25 = arith.index_cast %24 : i32 to index
    %26 = memref.load %arg4[%25] : memref<18xf32, #tpu.memory_space<smem>>
    %27 = vector.broadcast %26 : f32 to vector<8x128xf32>
    %28 = arith.mulf %27, %2 : vector<8x128xf32>
    %29 = arith.addf %23, %28 : vector<8x128xf32>
    %c5_i32 = arith.constant 5 : i32
    %30 = arith.addi %0, %c5_i32 : i32
    %31 = arith.index_cast %30 : i32 to index
    %32 = memref.load %arg4[%31] : memref<18xf32, #tpu.memory_space<smem>>
    %33 = vector.broadcast %32 : f32 to vector<8x128xf32>
    %34 = arith.addf %29, %33 : vector<8x128xf32>
    %c6_i32 = arith.constant 6 : i32
    %35 = arith.addi %0, %c6_i32 : i32
    %36 = arith.index_cast %35 : i32 to index
    %37 = memref.load %arg4[%36] : memref<18xf32, #tpu.memory_space<smem>>
    %38 = vector.broadcast %37 : f32 to vector<8x128xf32>
    %39 = arith.mulf %38, %1 : vector<8x128xf32>
    %c7_i32 = arith.constant 7 : i32
    %40 = arith.addi %0, %c7_i32 : i32
    %41 = arith.index_cast %40 : i32 to index
    %42 = memref.load %arg4[%41] : memref<18xf32, #tpu.memory_space<smem>>
    %43 = vector.broadcast %42 : f32 to vector<8x128xf32>
    %44 = arith.mulf %43, %2 : vector<8x128xf32>
    %45 = arith.addf %39, %44 : vector<8x128xf32>
    %c8_i32 = arith.constant 8 : i32
    %46 = arith.addi %0, %c8_i32 : i32
    %47 = arith.index_cast %46 : i32 to index
    %48 = memref.load %arg4[%47] : memref<18xf32, #tpu.memory_space<smem>>
    %49 = vector.broadcast %48 : f32 to vector<8x128xf32>
    %50 = arith.addf %45, %49 : vector<8x128xf32>
    %51 = arith.mulf %18, %18 : vector<8x128xf32>
    %52 = arith.mulf %34, %34 : vector<8x128xf32>
    %53 = arith.addf %51, %52 : vector<8x128xf32>
    %54 = arith.mulf %50, %50 : vector<8x128xf32>
    %55 = arith.addf %53, %54 : vector<8x128xf32>
    %cst = arith.constant 1.000000e-24 : f32
    %56 = vector.broadcast %cst : f32 to vector<8x128xf32>
    %57 = arith.maximumf %55, %56 : vector<8x128xf32>
    %58 = math.rsqrt %57 : vector<8x128xf32>
    %59 = arith.mulf %18, %58 : vector<8x128xf32>
    %c0_3 = arith.constant 0 : index
    %c0_4 = arith.constant 0 : index
    %c0_5 = arith.constant 0 : index
    %c0_6 = arith.constant 0 : index
    %60 = vector.load %arg5[%c0_3, %c0_4, %c0_5, %c0_6] : memref<1x3x8x128xf32, #tpu.memory_space<vmem>>, vector<1x1x8x128xf32>
    %61 = vector.shape_cast %60 : vector<1x1x8x128xf32> to vector<8x128xf32>
    %62 = vector.shape_cast %59 : vector<8x128xf32> to vector<1x1x8x128xf32>
    tpu.vector_store %arg5[%c0_3, %c0_4, %c0_5, %c0_6], %62 {strides = array<i32>} : memref<1x3x8x128xf32, #tpu.memory_space<vmem>>, vector<1x1x8x128xf32>,
    %63 = arith.mulf %34, %58 : vector<8x128xf32>
    %c0_7 = arith.constant 0 : index
    %c1 = arith.constant 1 : index
    %c0_8 = arith.constant 0 : index
    %c0_9 = arith.constant 0 : index
    %64 = vector.load %arg5[%c0_7, %c1, %c0_8, %c0_9] : memref<1x3x8x128xf32, #tpu.memory_space<vmem>>, vector<1x1x8x128xf32>
    %65 = vector.shape_cast %64 : vector<1x1x8x128xf32> to vector<8x128xf32>
    %66 = vector.shape_cast %63 : vector<8x128xf32> to vector<1x1x8x128xf32>
    tpu.vector_store %arg5[%c0_7, %c1, %c0_8, %c0_9], %66 {strides = array<i32>} : memref<1x3x8x128xf32, #tpu.memory_space<vmem>>, vector<1x1x8x128xf32>,
    %67 = arith.mulf %50, %58 : vector<8x128xf32>
    %c0_10 = arith.constant 0 : index
    %c2 = arith.constant 2 : index
    %c0_11 = arith.constant 0 : index
    %c0_12 = arith.constant 0 : index
    %68 = vector.load %arg5[%c0_10, %c2, %c0_11, %c0_12] : memref<1x3x8x128xf32, #tpu.memory_space<vmem>>, vector<1x1x8x128xf32>
    %69 = vector.shape_cast %68 : vector<1x1x8x128xf32> to vector<8x128xf32>
    %70 = vector.shape_cast %67 : vector<8x128xf32> to vector<1x1x8x128xf32>
    tpu.vector_store %arg5[%c0_10, %c2, %c0_11, %c0_12], %70 {strides = array<i32>} : memref<1x3x8x128xf32, #tpu.memory_space<vmem>>, vector<1x1x8x128xf32>,
    return
  }
  func.func @transform_0(%arg0: i32, %arg1: i32) -> (i32, i32) {
    %c0_i32 = arith.constant 0 : i32
    %c0_i32_0 = arith.constant 0 : i32
    return %arg0, %c0_i32 : i32, i32
  }
  func.func @transform_1(%arg0: i32, %arg1: i32) -> (i32, i32) {
    %c0_i32 = arith.constant 0 : i32
    %c0_i32_0 = arith.constant 0 : i32
    return %arg0, %c0_i32 : i32, i32
  }
  func.func @transform_2(%arg0: i32, %arg1: i32) -> i32 {
    %c0_i32 = arith.constant 0 : i32
    %c0_i32_0 = arith.constant 0 : i32
    return %c0_i32 : i32
  }
  func.func @transform_3(%arg0: i32, %arg1: i32) -> (i32, i32, i32, i32) {
    %c0_i32 = arith.constant 0 : i32
    %c0_i32_0 = arith.constant 0 : i32
    %c0_i32_1 = arith.constant 0 : i32
    return %arg1, %c0_i32, %arg0, %c0_i32_0 : i32, i32, i32, i32
  }
}

</mosaic_0001>

<llo_original>
// kernel: tpu_custom_call.1
$region0: #{tpu_custom_call.1}
  #allocation0 [shape = 'u32[]', space=smem, size = 0x4, offset = 0x4, fixed_abs, tag = 'smem constant byte address 0x4 - core index']
  #allocation1 [shape = 'u32[144,128]{1,0:T(1,128)}', space=vmem, size = 0x12000, scoped, tag = 'internal scratch']
  %s0 = inlined_call_operand.hbm [shape: f32[8,128], index: 0, kind: input, shape index: {}]
  %s1 = inlined_call_operand.hbm [shape: f32[8,128], index: 1, kind: input, shape index: {}]
  %s2 = inlined_call_operand.vmem [shape: f32[18], index: 2, kind: input, shape index: {}]
  %s3 = inlined_call_operand.hbm [shape: f32[2,3,8,128], index: 3, kind: output, shape index: {}]
  %s4 = sld [smem:[#allocation0]]
  $region57: #{tpu_custom_call.1} parent=0
    _
  %s6 = ssub.s32 1, %s4
  %s7 = scalar_select 0, %s6, %s4
  $region1: #{tpu_custom_call.1} parent=0
    #allocation2 [shape = 'u8[4096]{0}', space=vmem, size = 0x1000, scoped, tag = 'input window, operand 0, single buffered']
    #allocation3 [shape = 's32[2]{0}', space=sflag, size = 0x8, scoped, tag = 'scoped memory for tpu_custom_call.1']
    #allocation4 [shape = 's32[2]{0}', space=sflag, size = 0x8, scoped, tag = 'scoped memory for tpu_custom_call.1']
    #allocation5 [shape = 's32[2]{0}', space=sflag, size = 0x8, scoped, tag = 'scoped memory for tpu_custom_call.1']
    #allocation6 [shape = 'u8[4096]{0}', space=vmem, size = 0x1000, scoped, tag = 'input window, operand 1, single buffered']
    #allocation7 [shape = 's32[1]{0}', space=sflag, size = 0x4, scoped, tag = 'scoped memory for tpu_custom_call.1']
    #allocation8 [shape = 'u8[512]{0}', space=smem, size = 0x200, scoped, tag = 'input window, operand 2, single buffered']
    #allocation9 [shape = 'u8[24576]{0}', space=vmem, size = 0x6000, scoped, tag = 'output window, operand 0']
    %8 = vsyncpa [#allocation3], 0
    %9 = vsyncpa [#allocation7], 0
    %10 = vsyncpa [#allocation5], 0
    %11 = vsyncpa [#allocation4], 0
    %s12 = scalar_lea.sflag [#allocation4], 1
    %13 = vsyncpa %s12, 0
    loop: start=0, step=1, limit=4
    $region2: #{tpu_custom_call.1} parent=1 // loop_pre_header
      _
    $region3: #{tpu_custom_call.1} parent=1 // loop_header
      %s15 = sphi 0, %s19
      %p16 = scmp.ge.s32.totalorder %s15, 4
      %s22 = sphi 0, %s34
      %s23 = sphi 0, %s30
      %s24 = sphi 0, %s22
      %s25 = sphi 0, %s23
      %s26 = sphi 0, %s24
      %s27 = sphi 0, %s25
      %s37 = sphi 0, %s39
      %s40 = sphi 0, %s37
      %s41 = sphi 0, %s40
      %s57 = sphi 0, %s41
      %s63 = sphi 0, %s65
      %s66 = sphi 0, %s63
      %s67 = sphi 0, %s66
      %s83 = sphi 0, %s67
      %s87 = sphi 0, %s87
      %s89 = sphi 0, %s87
      %s90 = sphi 0, %s89
      %s104 = sphi 0, %s90
      %s112 = sphi 0, %s114
      %s115 = sphi 0, %s112
      %s116 = sphi 0, %s115
      %s132 = sphi 0, %s116
    $region4: #{tpu_custom_call.1} parent=1 // loop_header_branch
      %18 = sbr.rel (%p16) target = $region8
    $region5: #{tpu_custom_call.1} parent=1 // loop_body
      %s20 = ssub.s32 %s15, 1
      %s21 = ssub.s32 %s15, 2
      %s28 = sadd.s32 1, %s23
      %p29 = scmp.ge.s32.totalorder %s28, 2
      %s30 = scalar_select %p29, 0, %s28
      %s31 = sadd.s32 1, %s22
      %s32 = scalar_select %p29, %s31, %s22
      %p33 = scmp.ge.s32.totalorder %s32, 1
      %s34 = scalar_select %p33, 0, %s32
      %s35 = ssub.s32 %s22, %s34
      %p36 = scmp.eq.s32.totalorder %s35, 0
      %s38 = sadd.s32 %s37, 1
      %s39 = scalar_select %p36, %s37, %s38
      %p42 = pneg %p36
      %p43 = scmp.eq.s32.totalorder %s15, 1
      %p44 = por %p42, %p43
      %p45 = scmp.ne.s32.totalorder %s37, %s40
      %p46 = scmp.eq.s32.totalorder %s15, 0
      %p47 = por %p45, %p46
      %p48 = scmp.ne.s32.totalorder %s37, %s40
      %p49 = scmp.eq.s32.totalorder %s20, 1
      %p50 = por %p48, %p49
      %p51 = scmp.ne.s32.totalorder %s40, %s41
      %p52 = scmp.eq.s32.totalorder %s20, 0
      %p53 = por %p51, %p52
      %p54 = scmp.ne.s32.totalorder %s40, %s41
      %p55 = scmp.eq.s32.totalorder %s21, 1
      %p56 = por %p54, %p55
      %p58 = scmp.ne.s32.totalorder %s41, %s57
      %p59 = scmp.eq.s32.totalorder %s21, 0
      %p60 = por %p58, %p59
      %s61 = ssub.s32 %s22, %s34
      %p62 = scmp.eq.s32.totalorder %s61, 0
      %s64 = sadd.s32 %s63, 1
      %s65 = scalar_select %p62, %s63, %s64
      %p68 = pneg %p62
      %p69 = scmp.eq.s32.totalorder %s15, 1
      %p70 = por %p68, %p69
      %p71 = scmp.ne.s32.totalorder %s63, %s66
      %p72 = scmp.eq.s32.totalorder %s15, 0
      %p73 = por %p71, %p72
      %p74 = scmp.ne.s32.totalorder %s63, %s66
      %p75 = scmp.eq.s32.totalorder %s20, 1
      %p76 = por %p74, %p75
      %p77 = scmp.ne.s32.totalorder %s66, %s67
      %p78 = scmp.eq.s32.totalorder %s20, 0
      %p79 = por %p77, %p78
      %p80 = scmp.ne.s32.totalorder %s66, %s67
      %p81 = scmp.eq.s32.totalorder %s21, 1
      %p82 = por %p80, %p81
      %p84 = scmp.ne.s32.totalorder %s67, %s83
      %p85 = scmp.eq.s32.totalorder %s21, 0
      %p86 = por %p84, %p85
      %s88 = sadd.s32 %s87, 1
      %p91 = scmp.eq.s32.totalorder %s15, 1
      %p92 = scmp.ne.s32.totalorder %s87, %s89
      %p93 = scmp.eq.s32.totalorder %s15, 0
      %p94 = por %p92, %p93
      %p95 = scmp.ne.s32.totalorder %s87, %s89
      %p96 = scmp.eq.s32.totalorder %s20, 1
      %p97 = por %p95, %p96
      %p98 = scmp.ne.s32.totalorder %s89, %s90
      %p99 = scmp.eq.s32.totalorder %s20, 0
      %p100 = por %p98, %p99
      %p101 = scmp.ne.s32.totalorder %s89, %s90
      %p102 = scmp.eq.s32.totalorder %s21, 1
      %p103 = por %p101, %p102
      %p105 = scmp.ne.s32.totalorder %s90, %s104
      %p106 = scmp.eq.s32.totalorder %s21, 0
      %p107 = por %p105, %p106
      %s108 = ssub.s32 %s23, %s30
      %s109 = ssub.s32 %s22, %s34
      %s110 = sor.u32 %s108, %s109
      %p111 = scmp.eq.s32.totalorder %s110, 0
      %s113 = sadd.s32 %s112, 1
      %s114 = scalar_select %p111, %s112, %s113
      %p117 = pneg %p111
      %p118 = scmp.eq.s32.totalorder %s15, 1
      %p119 = por %p117, %p118
      %p120 = scmp.ne.s32.totalorder %s112, %s115
      %p121 = scmp.eq.s32.totalorder %s15, 0
      %p122 = por %p120, %p121
      %p123 = scmp.ne.s32.totalorder %s112, %s115
      %p124 = scmp.eq.s32.totalorder %s20, 1
      %p125 = por %p123, %p124
      %p126 = scmp.ne.s32.totalorder %s115, %s116
      %p127 = scmp.eq.s32.totalorder %s20, 0
      %p128 = por %p126, %p127
      %p129 = scmp.ne.s32.totalorder %s115, %s116
      %p130 = scmp.eq.s32.totalorder %s21, 1
      %p131 = por %p129, %p130
      %p133 = scmp.ne.s32.totalorder %s116, %s132
      %p134 = scmp.eq.s32.totalorder %s21, 0
      %p135 = por %p133, %p134
      %p136 = scmp.le.s32.totalorder 1, %s15
      %p137 = scmp.lt.s32.totalorder %s15, 3
      %p138 = pnand %p136, %p137
      %p139 = pneg %p138
      // Predicated region
      $region9: #{tpu_custom_call.1} parent=5 // pred_check
        _
      $region10: #{tpu_custom_call.1} parent=5 // pred_check_branch
        %141 = sbr.rel (%p138) target = $region12
      $region11: #{tpu_custom_call.1} parent=5 // pred_region
        %s142 = ssub.s32 %s15, 1
        // Predicated region
        $region13: #{tpu_custom_call.1} parent=11 // pred_check
          %p143 = pneg %p53
        $region14: #{tpu_custom_call.1} parent=11 // pred_check_branch
          %145 = sbr.rel (%p143) target = $region16
        $region15: #{tpu_custom_call.1} parent=11 // pred_region
          %s147 = ssub.s32 128, 128
          %148 = vsyncadd [#allocation3], %s147
          %s149 = smul.addr %s24, 128
          %s150 = scalar_lea.hbm %s0, %s149
          %s152 = sshll.u32 [#allocation2], 4
          %s153 = int_to_ptr.vmem [resolvable:$true] %s152
          %155 = dma.hbm_to_vmem [thread:$0]  %s150, 128, %s153, [#allocation3]
        $region16: #{tpu_custom_call.1} parent=11 // pred_fallthru
          _
        // Predicated region
        $region17: #{tpu_custom_call.1} parent=11 // pred_check
          %p156 = pneg %p79
        $region18: #{tpu_custom_call.1} parent=11 // pred_check_branch
          %158 = sbr.rel (%p156) target = $region20
        $region19: #{tpu_custom_call.1} parent=11 // pred_region
          %s160 = ssub.s32 128, 128
          %161 = vsyncadd [#allocation7], %s160
          %s162 = smul.addr %s24, 128
          %s163 = scalar_lea.hbm %s1, %s162
          %s165 = sshll.u32 [#allocation6], 4
          %s166 = int_to_ptr.vmem [resolvable:$true] %s165
          %168 = dma.hbm_to_vmem [thread:$0]  %s163, 128, %s166, [#allocation7]
        $region20: #{tpu_custom_call.1} parent=11 // pred_fallthru
          _
        // Predicated region
        $region21: #{tpu_custom_call.1} parent=11 // pred_check
          %p169 = pneg %p100
        $region22: #{tpu_custom_call.1} parent=11 // pred_check_branch
          %171 = sbr.rel (%p169) target = $region24
        $region23: #{tpu_custom_call.1} parent=11 // pred_region
          %s173 = ssub.s32 16, 16
          %174 = vsyncadd [#allocation5], %s173
          %s176 = sshll.u32 %s2, 4
          %s177 = int_to_ptr.vmem [resolvable:$true] %s176
          %179 = dma.vmem_to_smem %s177, 16, [#allocation8], [#allocation5]
        $region24: #{tpu_custom_call.1} parent=11 // pred_fallthru
          _
      $region12: #{tpu_custom_call.1} parent=5 // pred_fallthru
        _
      %p180 = scmp.lt.s32.totalorder %s15, 2
      // Predicated region
      $region25: #{tpu_custom_call.1} parent=5 // pred_check
        %p181 = pneg %p180
      $region26: #{tpu_custom_call.1} parent=5 // pred_check_branch
        %183 = sbr.rel (%p181) target = $region28
      $region27: #{tpu_custom_call.1} parent=5 // pred_region
        _
      $region28: #{tpu_custom_call.1} parent=5 // pred_fallthru
        _
      %p184 = scmp.le.s32.totalorder 1, %s15
      %p185 = scmp.lt.s32.totalorder %s15, 3
      %p186 = pnand %p184, %p185
      %p187 = pneg %p186
      // Predicated region
      $region29: #{tpu_custom_call.1} parent=5 // pred_check
        _
      $region30: #{tpu_custom_call.1} parent=5 // pred_check_branch
        %189 = sbr.rel (%p186) target = $region32
      $region31: #{tpu_custom_call.1} parent=5 // pred_region
        %s190 = ssub.s32 %s15, 1
        // Predicated region
        $region33: #{tpu_custom_call.1} parent=31 // pred_check
          %p191 = pneg %p53
        $region34: #{tpu_custom_call.1} parent=31 // pred_check_branch
          %193 = sbr.rel (%p191) target = $region36
        $region35: #{tpu_custom_call.1} parent=31 // pred_region
          %194 = dma.done [#allocation3], 128
        $region36: #{tpu_custom_call.1} parent=31 // pred_fallthru
          _
        // Predicated region
        $region37: #{tpu_custom_call.1} parent=31 // pred_check
          %p195 = pneg %p79
        $region38: #{tpu_custom_call.1} parent=31 // pred_check_branch
          %197 = sbr.rel (%p195) target = $region40
        $region39: #{tpu_custom_call.1} parent=31 // pred_region
          %198 = dma.done [#allocation7], 128
        $region40: #{tpu_custom_call.1} parent=31 // pred_fallthru
          _
        // Predicated region
        $region41: #{tpu_custom_call.1} parent=31 // pred_check
          %p199 = pneg %p100
        $region42: #{tpu_custom_call.1} parent=31 // pred_check_branch
          %201 = sbr.rel (%p199) target = $region44
        $region43: #{tpu_custom_call.1} parent=31 // pred_region
          %202 = dma.done [#allocation5], 16
        $region44: #{tpu_custom_call.1} parent=31 // pred_fallthru
          _
        %203 = sfence
        %p204 = pneg %p53
        %p205 = pneg %p50
        %p206 = pneg %p79
        %p207 = pneg %p76
        %p208 = pneg %p100
        %p209 = pneg %p97
        %p210 = pneg %p128
        %p211 = pneg %p125
        %s212 = sand.u32 %s115, 1
        %s213 = scalar_lea.sflag [#allocation4], %s212
        %s214 = sand.u32 %s115, 1
        %s215 = smul.addr %s214, 24
        %s216 = scalar_lea.vmem [#allocation9], %s215
        %s217 = smul.u32 %s25, 9
        %v218 = vld [vmem:[#allocation2] sm:$0xff]
        %v219 = vld [vmem:[#allocation6] sm:$0xff]
        %s220 = sld [smem:[#allocation8 + %s217]]
        %v221 = vstv %s220
        %v222 = vmul.f32 %v221, %v218
        %s223 = sadd.s32 %s217, 1
        %s224 = sld [smem:[#allocation8 + %s223]]
        %v225 = vstv %s224
        %v226 = vmul.f32 %v225, %v219
        %v227 = vadd.f32 %v222, %v226
        %s228 = sadd.s32 %s217, 2
        %s229 = sld [smem:[#allocation8 + %s228]]
        %v230 = vstv %s229
        %v231 = vadd.f32 %v227, %v230
        %s232 = sadd.s32 %s217, 3
        %s233 = sld [smem:[#allocation8 + %s232]]
        %v234 = vstv %s233
        %v235 = vmul.f32 %v234, %v218
        %s236 = sadd.s32 %s217, 4
        %s237 = sld [smem:[#allocation8 + %s236]]
        %v238 = vstv %s237
        %v239 = vmul.f32 %v238, %v219
        %v240 = vadd.f32 %v235, %v239
        %s241 = sadd.s32 %s217, 5
        %s242 = sld [smem:[#allocation8 + %s241]]
        %v243 = vstv %s242
        %v244 = vadd.f32 %v240, %v243
        %s245 = sadd.s32 %s217, 6
        %s246 = sld [smem:[#allocation8 + %s245]]
        %v247 = vstv %s246
        %v248 = vmul.f32 %v247, %v218
        %s249 = sadd.s32 %s217, 7
        %s250 = sld [smem:[#allocation8 + %s249]]
        %v251 = vstv %s250
        %v252 = vmul.f32 %v251, %v219
        %v253 = vadd.f32 %v248, %v252
        %s254 = sadd.s32 %s217, 8
        %s255 = sld [smem:[#allocation8 + %s254]]
        %v256 = vstv %s255
        %v257 = vadd.f32 %v253, %v256
        %v258 = vmul.f32 %v231, %v231
        %v259 = vmul.f32 %v244, %v244
        %v260 = vadd.f32 %v258, %v259
        %v261 = vmul.f32 %v257, %v257
        %v262 = vadd.f32 %v260, %v261
        %v263 = vmax.f32 %v262, 1e-24
        %v264 = vrsqrt.pop %v263
        %v265 = vmul.f32 %v231, %v264
        %266 = vst [vmem:[%s216] sm:$0xff] %v265
        %v267 = vmul.f32 %v244, %v264
        %s268 = scalar_lea.vmem %s216, 8 [#allocation9]
        %269 = vst [vmem:[%s268] sm:$0xff] %v267
        %v270 = vmul.f32 %v257, %v264
        %s271 = scalar_lea.vmem %s216, 16 [#allocation9]
        %272 = vst [vmem:[%s271] sm:$0xff] %v270
        %s273 = sand.u32 %s115, 1
        %s274 = scalar_lea.sflag [#allocation4], %s273
        %s275 = sand.u32 %s115, 1
        %s276 = smul.addr %s275, 24
        %s277 = scalar_lea.vmem [#allocation9], %s276
        // Predicated region
        $region45: #{tpu_custom_call.1} parent=31 // pred_check
          %p278 = pneg %p125
        $region46: #{tpu_custom_call.1} parent=31 // pred_check_branch
          %280 = sbr.rel (%p278) target = $region48
        $region47: #{tpu_custom_call.1} parent=31 // pred_region
          %s282 = ssub.s32 384, 384
          %283 = vsyncadd %s274, %s282
          %s284 = smul.addr %s25, 3
          %s285 = sadd.s32 %s24, %s284
          %s286 = smul.addr %s285, 128
          %s287 = scalar_lea.hbm %s3, %s286
          %s288 = sshll.u32 %s277, 4
          %s289 = int_to_ptr.vmem [resolvable:$true] %s288
          %294 = dma.vmem_to_hbm [thread:$0]  %s289, 384, %s287, %s274, 128, 128, 8
        $region48: #{tpu_custom_call.1} parent=31 // pred_fallthru
          _
      $region32: #{tpu_custom_call.1} parent=5 // pred_fallthru
        _
      %p295 = scmp.le.s32.totalorder 2, %s15
      // Predicated region
      $region49: #{tpu_custom_call.1} parent=5 // pred_check
        %p296 = pneg %p295
      $region50: #{tpu_custom_call.1} parent=5 // pred_check_branch
        %298 = sbr.rel (%p296) target = $region52
      $region51: #{tpu_custom_call.1} parent=5 // pred_region
        %s299 = ssub.s32 %s15, 2
        // Predicated region
        $region53: #{tpu_custom_call.1} parent=51 // pred_check
          %p300 = pneg %p131
        $region54: #{tpu_custom_call.1} parent=51 // pred_check_branch
          %302 = sbr.rel (%p300) target = $region56
        $region55: #{tpu_custom_call.1} parent=51 // pred_region
          %s303 = sand.u32 %s116, 1
          %s304 = scalar_lea.sflag [#allocation4], %s303
          %s305 = sand.u32 %s116, 1
          %s306 = smul.addr %s305, 24
          %s307 = scalar_lea.vmem [#allocation9], %s306
          %308 = dma.done %s304, 384
        $region56: #{tpu_custom_call.1} parent=51 // pred_fallthru
          _
      $region52: #{tpu_custom_call.1} parent=5 // pred_fallthru
        _
    $region6: #{tpu_custom_call.1} parent=1 // loop_footer
      %s19 = sadd.s32 1, %s15
    $region7: #{tpu_custom_call.1} parent=1 // loop_footer_branch
      %14 = sbr.rel target = $region3
    $region8: #{tpu_custom_call.1} parent=1 // loop_exit
      _
    %309 = vsyncpa [#allocation3], 1
    %s310 = scalar_lea.sflag [#allocation3], 1
    %311 = vsyncpa %s310, 1
    %312 = vsyncpa [#allocation7], 1
    %313 = vsyncpa [#allocation4], 1
    %s314 = scalar_lea.sflag [#allocation4], 1
    %315 = vsyncpa %s314, 1
    %316 = vsyncpa [#allocation5], 1
    %s317 = scalar_lea.sflag [#allocation5], 1
    %318 = vsyncpa %s317, 1

</llo_original>
